<compile_context>
chip_gen: v6e
topology: v6e:2x2x1
jax: 0.10.0
libtpu: 0.0.40
codegen_flags: <defaults>
</compile_context>

<pallas_src>
import jax
import jax.numpy as jnp
import numpy as np
from jax.experimental import pallas as pl
from jax.experimental.pallas import tpu as pltpu

_LANE = 128


def _round_up(x, m):
    return (x + m - 1) // m * m


def _choose_l_tile(L, max_tile=1024):
    """Largest tile dividing L; multiple of 16 when actually tiling."""
    if L <= max_tile:
        return L
    max_tile = max(16, max_tile - max_tile % 16)
    for t in range(max_tile, 15, -16):
        if L % t == 0:
            return t
    return L  # fall back to whole sequence per step


def _conv_block_kernel(p_ref, w1_ref, b1_ref, w2_ref, b2_ref, out_ref):
    """One (batch, L-tile) pair per grid step.

    p_ref   : (1, 1, TL+2, K1P) bf16  im2col patches for conv1, haloed by one
                                      row each side (rows = conv1 outputs
                                      t*TL-1 .. t*TL+TL).
    w1_ref  : (K1P, COP)        bf16  conv1 weight (tap-major), BN1 scale folded.
    b1_ref  : (1, COP)          f32   folded conv1+BN1 bias.
    w2_ref  : (3, COP, COP)     bf16  conv2 weight (tap-major), BN2 scale folded.
    b2_ref  : (1, COP)          f32   folded conv2+BN2 bias.
    out_ref : (1, TL//2, COP)   f32   max-pooled output tile.
    """
    t = pl.program_id(1)
    n_t = pl.num_programs(1)
    tl_p2 = p_ref.shape[2]
    tl = tl_p2 - 2

    # ---- Conv1 + BN1 (folded) + ReLU: one lane-dense MXU matmul ----
    patches = p_ref[0, 0]                                         # (TL+2, K1P)
    acc1 = jnp.dot(patches, w1_ref[...],
                   preferred_element_type=jnp.float32)            # (TL+2, COP)
    h = jnp.maximum(acc1 + b1_ref[...], 0.0)

    # Conv2's zero-padding applies to the post-BN/ReLU intermediate: zero the
    # halo rows that fall outside the global sequence (first tile's row 0,
    # last tile's row TL+1).  Mask instead of concatenate — no VMEM copy.
    row = jax.lax.broadcasted_iota(jnp.int32, (tl_p2, 1), 0)
    valid = jnp.logical_and(jnp.logical_or(t > 0, row > 0),
                            jnp.logical_or(t < n_t - 1, row < tl_p2 - 1))
    h = jnp.where(valid, h, 0.0)
    hb = h.astype(jnp.bfloat16)

    # ---- Conv2 (k=3, p=1) + BN2 (folded) + ReLU: 3 shifted K=128 matmuls ----
    acc2 = jnp.dot(hb[0:tl, :], w2_ref[0],
                   preferred_element_type=jnp.float32)
    acc2 += jnp.dot(hb[1:tl + 1, :], w2_ref[1],
                    preferred_element_type=jnp.float32)
    acc2 += jnp.dot(hb[2:tl + 2, :], w2_ref[2],
                    preferred_element_type=jnp.float32)
    y = jnp.maximum(acc2 + b2_ref[...], 0.0)                      # (TL, COP)

    # ---- MaxPool1d(kernel=2, stride=2) along the tile's L axis ----
    pooled = jnp.max(y.reshape(tl // 2, 2, y.shape[-1]), axis=1)  # (TL//2, COP)
    out_ref[0] = pooled.astype(out_ref.dtype)


def conv_block_1d(x_ncl, params, *, l_tile=1024):
    """x_ncl: (B, Cin, L) float32, PyTorch NCL layout. Returns (B, Cout, L//2)."""
    w1, b1, g1, be1, m1, v1, w2, b2, g2, be2, m2, v2 = (
        params["w1"], params["b1"], params["gamma1"], params["beta1"],
        params["mean1"], params["var1"],
        params["w2"], params["b2"], params["gamma2"], params["beta2"],
        params["mean2"], params["var2"])
    eps = 1e-5

    B, Cin, L = x_ncl.shape
    Cout = w1.shape[0]
    assert L % 2 == 0, "MaxPool1d(2) requires an even length"
    # TODO(synk): training-mode BatchNorm (batch stats + running-stat updates)
    # is not implemented; this is the eval-mode forward (folded running stats).

    TL = _choose_l_tile(L, l_tile)
    nL = L // TL
    assert nL * TL == L
    K1 = 5 * Cin
    K1P = _round_up(K1, _LANE)          # conv1 contraction dim, lane-padded
    COP = _round_up(Cout, _LANE)        # channel dim on the lane axis

    # ---------------- glue: BN folding into weights / biases ----------------
    s1 = (g1 / jnp.sqrt(v1 + eps)).astype(jnp.float32)
    s2 = (g2 / jnp.sqrt(v2 + eps)).astype(jnp.float32)
    b1f = (be1 + (b1 - m1) * s1).astype(jnp.float32)
    b2f = (be2 + (b2 - m2) * s2).astype(jnp.float32)

    # Conv1 weight (Cout, Cin, 5) -> tap-major (5*Cin, Cout), BN1 scale folded.
    w1_mat = jnp.transpose(w1, (2, 1, 0)).reshape(K1, Cout).astype(jnp.float32)
    w1_mat = w1_mat * s1[None, :]
    w1_p = jnp.zeros((K1P, COP), jnp.float32).at[:K1, :Cout].set(w1_mat)
    w1_p = w1_p.astype(jnp.bfloat16)

    # Conv2 weight (Cout, Cout, 3) -> tap-major (3, Cin2, Cout), BN2 scale folded.
    w2_t = jnp.transpose(w2, (2, 1, 0)).astype(jnp.float32) * s2[None, None, :]
    w2_p = jnp.zeros((3, COP, COP), jnp.float32).at[:, :Cout, :Cout].set(w2_t)
    w2_p = w2_p.astype(jnp.bfloat16)

    b1_p = jnp.zeros((1, COP), jnp.float32).at[0, :Cout].set(b1f)
    b2_p = jnp.zeros((1, COP), jnp.float32).at[0, :Cout].set(b2f)

    # -------------- glue: im2col patches with per-tile halo -----------------
    # Extended conv1 output rows e = -1 .. L (the +/-1 halo is conv2's padding;
    # the kernel zeroes the out-of-range halo rows after BN/ReLU).
    x_nlc = jnp.transpose(x_ncl, (0, 2, 1)).astype(jnp.float32)    # (B, L, Cin)
    x_p3 = jnp.pad(x_nlc, ((0, 0), (3, 3), (0, 0)))                # (B, L+6, Cin)
    taps = [x_p3[:, k:k + L + 2, :] for k in range(5)]
    pe = jnp.concatenate(taps, axis=-1)                            # (B, L+2, 5*Cin)
    pe = jnp.pad(pe, ((0, 0), (0, 0), (0, K1P - K1)))              # lane-pad K
    row_idx = jnp.arange(nL)[:, None] * TL + jnp.arange(TL + 2)[None, :]
    ph = pe[:, row_idx, :].astype(jnp.bfloat16)                    # (B,nL,TL+2,K1P)

    out_pad = pl.pallas_call(
        _conv_block_kernel,
        out_shape=jax.ShapeDtypeStruct((B, L // 2, COP), jnp.float32),
        grid_spec=pltpu.PrefetchScalarGridSpec(
            num_scalar_prefetch=0,
            grid=(B, nL),
            in_specs=[
                pl.BlockSpec((1, 1, TL + 2, K1P), lambda b, t: (b, t, 0, 0)),
                pl.BlockSpec((K1P, COP), lambda b, t: (0, 0)),
                pl.BlockSpec((1, COP), lambda b, t: (0, 0)),
                pl.BlockSpec((3, COP, COP), lambda b, t: (0, 0, 0)),
                pl.BlockSpec((1, COP), lambda b, t: (0, 0)),
            ],
            out_specs=pl.BlockSpec((1, TL // 2, COP), lambda b, t: (b, t, 0)),
        ),
        compiler_params=pltpu.CompilerParams(
            dimension_semantics=("parallel", "parallel"),
            vmem_limit_bytes=48 * 1024 * 1024,   # headroom within v7x 64 MiB/TC
        ),
    )(ph, w1_p, b1_p, w2_p, b2_p)

    # Strip lane padding; return PyTorch NCL layout.
    return jnp.transpose(out_pad[:, :, :Cout], (0, 2, 1))          # (B,Cout,L//2)


def _reference(x_ncl, params):
    """Pure-JAX reference mirroring the PyTorch forward (inference-mode BN)."""
    eps = 1e-5
    dn = ("NCH", "OIH", "NCH")

    def bn(x, g, b, m, v):
        return (x - m[None, :, None]) / jnp.sqrt(v[None, :, None] + eps) \
               * g[None, :, None] + b[None, :, None]

    h = jax.lax.conv_general_dilated(x_ncl, params["w1"], (1,), [(2, 2)],
                                     dimension_numbers=dn)
    h = h + params["b1"][None, :, None]
    h = jnp.maximum(bn(h, params["gamma1"], params["beta1"],
                       params["mean1"], params["var1"]), 0.0)
    y = jax.lax.conv_general_dilated(h, params["w2"], (1,), [(1, 1)],
                                     dimension_numbers=dn)
    y = y + params["b2"][None, :, None]
    y = jnp.maximum(bn(y, params["gamma2"], params["beta2"],
                       params["mean2"], params["var2"]), 0.0)
    B, C, L = y.shape
    return jnp.max(y.reshape(B, C, L // 2, 2), axis=-1)


def _init_params(key, cin, cout):
    ks = jax.random.split(key, 8)
    return {
        "w1": 0.2 * jax.random.normal(ks[0], (cout, cin, 5), jnp.float32),
        "b1": 0.1 * jax.random.normal(ks[1], (cout,), jnp.float32),
        "gamma1": 1.0 + 0.1 * jax.random.normal(ks[2], (cout,), jnp.float32),
        "beta1": 0.05 * jax.random.normal(ks[3], (cout,), jnp.float32),
        "mean1": 0.02 * jnp.arange(cout, dtype=jnp.float32),
        "var1": 1.0 + 0.05 * jnp.arange(cout, dtype=jnp.float32),
        "w2": 0.2 * jax.random.normal(ks[4], (cout, cout, 3), jnp.float32),
        "b2": 0.1 * jax.random.normal(ks[5], (cout,), jnp.float32),
        "gamma2": 1.0 + 0.1 * jax.random.normal(ks[6], (cout,), jnp.float32),
        "beta2": 0.05 * jax.random.normal(ks[7], (cout,), jnp.float32),
        "mean2": -0.01 * jnp.arange(cout, dtype=jnp.float32),
        "var2": 1.0 + 0.03 * jnp.arange(cout, dtype=jnp.float32),
    }


if __name__ == "__main__":
    key = jax.random.PRNGKey(0)
    kx, kp = jax.random.split(key)

    B, Cin, Cout, L = 2, 4, 8, 16
    x = jax.random.normal(kx, (B, Cin, L), dtype=jnp.float32)
    params = _init_params(kp, Cin, Cout)

    out = jax.block_until_ready(conv_block_1d(x, params))
    ref = jax.block_until_ready(_reference(x, params))

    assert out.shape == (B, Cout, L // 2), out.shape
    # bf16 matmul inputs with f32 accumulation -> looser tolerance than pure f32.
    np.testing.assert_allclose(np.asarray(out), np.asarray(ref),
                               rtol=5e-2, atol=5e-2)
    print("KERNEL_OK")
</pallas_src>

<mosaic_0001>
module attributes {stable_mosaic.version = 11 : i64} {
  func.func @_conv_block_kernel(%arg0: i32, %arg1: i32, %arg2: memref<1x1x18x128xbf16, #tpu.memory_space<vmem>>, %arg3: memref<128x128xbf16, #tpu.memory_space<vmem>>, %arg4: memref<1x128xf32, #tpu.memory_space<vmem>>, %arg5: memref<3x128x128xbf16, #tpu.memory_space<vmem>>, %arg6: memref<1x128xf32, #tpu.memory_space<vmem>>, %arg7: memref<1x8x128xf32, #tpu.memory_space<vmem>>) attributes {dimension_semantics = [#tpu.dimension_semantics<parallel>, #tpu.dimension_semantics<parallel>], iteration_bounds = array<i64: 2, 1>, scalar_prefetch = 0 : i64, scratch_operands = 0 : i64, tpu.core_type = #tpu.core_type<tc>, window_params = [{transform_indices = @transform_0, window_bounds = array<i64: 1, 1, 18, 128>}, {pipeline_mode = #tpu.pipeline_mode<synchronous>, transform_indices = @transform_1, window_bounds = array<i64: 128, 128>}, {pipeline_mode = #tpu.pipeline_mode<synchronous>, transform_indices = @transform_2, window_bounds = array<i64: 1, 128>}, {pipeline_mode = #tpu.pipeline_mode<synchronous>, transform_indices = @transform_3, window_bounds = array<i64: 3, 128, 128>}, {pipeline_mode = #tpu.pipeline_mode<synchronous>, transform_indices = @transform_4, window_bounds = array<i64: 1, 128>}, {transform_indices = @transform_5, window_bounds = array<i64: 1, 8, 128>}]} {
    %c0 = arith.constant 0 : index
    %c0_0 = arith.constant 0 : index
    %c0_1 = arith.constant 0 : index
    %c0_2 = arith.constant 0 : index
    %0 = vector.load %arg2[%c0, %c0_0, %c0_1, %c0_2] : memref<1x1x18x128xbf16, #tpu.memory_space<vmem>>, vector<1x1x18x128xbf16>
    %1 = vector.shape_cast %0 : vector<1x1x18x128xbf16> to vector<18x128xbf16>
    %c0_3 = arith.constant 0 : index
    %c0_4 = arith.constant 0 : index
    %2 = vector.load %arg3[%c0_3, %c0_4] : memref<128x128xbf16, #tpu.memory_space<vmem>>, vector<128x128xbf16>
    %cst = arith.constant dense<0.000000e+00> : vector<18x128xf32>
    %3 = tpu.matmul %1, %2, %cst {dimension_numbers = #tpu.dot_dimension_numbers<[1], [0], [0], [1], [0, 0, 1, 1], [], []>} : vector<18x128xbf16>, vector<128x128xbf16>, vector<18x128xf32> -> vector<18x128xf32>
    %c0_5 = arith.constant 0 : index
    %c0_6 = arith.constant 0 : index
    %4 = vector.load %arg4[%c0_5, %c0_6] : memref<1x128xf32, #tpu.memory_space<vmem>>, vector<1x128xf32>
    %5 = vector.broadcast %4 : vector<1x128xf32> to vector<18x128xf32>
    %6 = arith.addf %3, %5 : vector<18x128xf32>
    %cst_7 = arith.constant 0.000000e+00 : f32
    %7 = vector.broadcast %cst_7 : f32 to vector<18x128xf32>
    %8 = arith.maximumf %6, %7 : vector<18x128xf32>
    %9 = tpu.iota {dimensions = array<i32: 0>} : vector<18x1xi32>
    %c0_i32 = arith.constant 0 : i32
    %10 = arith.cmpi sgt, %arg1, %c0_i32 : i32
    %c0_i32_8 = arith.constant 0 : i32
    %11 = vector.broadcast %c0_i32_8 : i32 to vector<18x1xi32>
    %12 = arith.cmpi sgt, %9, %11 : vector<18x1xi32>
    %13 = vector.broadcast %10 : i1 to vector<18x1xi1>
    %14 = arith.ori %13, %12 : vector<18x1xi1>
    %c0_i32_9 = arith.constant 0 : i32
    %15 = arith.cmpi slt, %arg1, %c0_i32_9 : i32
    %c17_i32 = arith.constant 17 : i32
    %16 = vector.broadcast %c17_i32 : i32 to vector<18x1xi32>
    %17 = arith.cmpi slt, %9, %16 : vector<18x1xi32>
    %18 = vector.broadcast %15 : i1 to vector<18x1xi1>
    %19 = arith.ori %18, %17 : vector<18x1xi1>
    %20 = arith.andi %14, %19 : vector<18x1xi1>
    %cst_10 = arith.constant 0.000000e+00 : f32
    %21 = vector.shape_cast %20 : vector<18x1xi1> to vector<18x1xi1>
    %22 = vector.broadcast %21 : vector<18x1xi1> to vector<18x128xi1>
    %23 = vector.broadcast %cst_10 : f32 to vector<18x128xf32>
    %24 = arith.select %22, %8, %23 : vector<18x128xi1>, vector<18x128xf32>
    %25 = arith.truncf %24 : vector<18x128xf32> to vector<18x128xbf16>
    %26 = vector.extract_strided_slice %25 {offsets = [0, 0], sizes = [16, 128], strides = [1, 1]} : vector<18x128xbf16> to vector<16x128xbf16>
    %c0_11 = arith.constant 0 : index
    %c0_12 = arith.constant 0 : index
    %c0_13 = arith.constant 0 : index
    %27 = vector.load %arg5[%c0_11, %c0_12, %c0_13] : memref<3x128x128xbf16, #tpu.memory_space<vmem>>, vector<1x128x128xbf16>
    %28 = vector.shape_cast %27 : vector<1x128x128xbf16> to vector<128x128xbf16>
    %cst_14 = arith.constant dense<0.000000e+00> : vector<16x128xf32>
    %29 = tpu.matmul %26, %28, %cst_14 {dimension_numbers = #tpu.dot_dimension_numbers<[1], [0], [0], [1], [0, 0, 1, 1], [], []>} : vector<16x128xbf16>, vector<128x128xbf16>, vector<16x128xf32> -> vector<16x128xf32>
    %30 = vector.extract_strided_slice %25 {offsets = [1, 0], sizes = [16, 128], strides = [1, 1]} : vector<18x128xbf16> to vector<16x128xbf16>
    %c1 = arith.constant 1 : index
    %c0_15 = arith.constant 0 : index
    %c0_16 = arith.constant 0 : index
    %31 = vector.load %arg5[%c1, %c0_15, %c0_16] : memref<3x128x128xbf16, #tpu.memory_space<vmem>>, vector<1x128x128xbf16>
    %32 = vector.shape_cast %31 : vector<1x128x128xbf16> to vector<128x128xbf16>
    %cst_17 = arith.constant dense<0.000000e+00> : vector<16x128xf32>
    %33 = tpu.matmul %30, %32, %cst_17 {dimension_numbers = #tpu.dot_dimension_numbers<[1], [0], [0], [1], [0, 0, 1, 1], [], []>} : vector<16x128xbf16>, vector<128x128xbf16>, vector<16x128xf32> -> vector<16x128xf32>
    %34 = arith.addf %29, %33 : vector<16x128xf32>
    %35 = vector.extract_strided_slice %25 {offsets = [2, 0], sizes = [16, 128], strides = [1, 1]} : vector<18x128xbf16> to vector<16x128xbf16>
    %c2 = arith.constant 2 : index
    %c0_18 = arith.constant 0 : index
    %c0_19 = arith.constant 0 : index
    %36 = vector.load %arg5[%c2, %c0_18, %c0_19] : memref<3x128x128xbf16, #tpu.memory_space<vmem>>, vector<1x128x128xbf16>
    %37 = vector.shape_cast %36 : vector<1x128x128xbf16> to vector<128x128xbf16>
    %cst_20 = arith.constant dense<0.000000e+00> : vector<16x128xf32>
    %38 = tpu.matmul %35, %37, %cst_20 {dimension_numbers = #tpu.dot_dimension_numbers<[1], [0], [0], [1], [0, 0, 1, 1], [], []>} : vector<16x128xbf16>, vector<128x128xbf16>, vector<16x128xf32> -> vector<16x128xf32>
    %39 = arith.addf %34, %38 : vector<16x128xf32>
    %c0_21 = arith.constant 0 : index
    %c0_22 = arith.constant 0 : index
    %40 = vector.load %arg6[%c0_21, %c0_22] : memref<1x128xf32, #tpu.memory_space<vmem>>, vector<1x128xf32>
    %41 = vector.broadcast %40 : vector<1x128xf32> to vector<16x128xf32>
    %42 = arith.addf %39, %41 : vector<16x128xf32>
    %cst_23 = arith.constant 0.000000e+00 : f32
    %43 = vector.broadcast %cst_23 : f32 to vector<16x128xf32>
    %44 = arith.maximumf %42, %43 : vector<16x128xf32>
    %45 = vector.shape_cast %44 : vector<16x128xf32> to vector<8x2x128xf32>
    %cst_24 = arith.constant dense<0xFF800000> : vector<8x128xf32>
    %46 = vector.multi_reduction <maximumf>, %45, %cst_24 [1] : vector<8x2x128xf32> to vector<8x128xf32>
    %c0_25 = arith.constant 0 : index
    %c0_26 = arith.constant 0 : index
    %c0_27 = arith.constant 0 : index
    %47 = vector.load %arg7[%c0_25, %c0_26, %c0_27] : memref<1x8x128xf32, #tpu.memory_space<vmem>>, vector<1x8x128xf32>
    %48 = vector.shape_cast %47 : vector<1x8x128xf32> to vector<8x128xf32>
    %49 = vector.shape_cast %46 : vector<8x128xf32> to vector<1x8x128xf32>
    tpu.vector_store %arg7[%c0_25, %c0_26, %c0_27], %49 {strides = array<i32>} : memref<1x8x128xf32, #tpu.memory_space<vmem>>, vector<1x8x128xf32>,
    return
  }
  func.func @transform_0(%arg0: i32, %arg1: i32) -> (i32, i32, i32, i32) {
    %c0_i32 = arith.constant 0 : i32
    %c0_i32_0 = arith.constant 0 : i32
    %c0_i32_1 = arith.constant 0 : i32
    return %arg0, %arg1, %c0_i32, %c0_i32_0 : i32, i32, i32, i32
  }
  func.func @transform_1(%arg0: i32, %arg1: i32) -> (i32, i32) {
    %c0_i32 = arith.constant 0 : i32
    %c0_i32_0 = arith.constant 0 : i32
    %c0_i32_1 = arith.constant 0 : i32
    return %c0_i32, %c0_i32_0 : i32, i32
  }
  func.func @transform_2(%arg0: i32, %arg1: i32) -> (i32, i32) {
    %c0_i32 = arith.constant 0 : i32
    %c0_i32_0 = arith.constant 0 : i32
    %c0_i32_1 = arith.constant 0 : i32
    return %c0_i32, %c0_i32_0 : i32, i32
  }
  func.func @transform_3(%arg0: i32, %arg1: i32) -> (i32, i32, i32) {
    %c0_i32 = arith.constant 0 : i32
    %c0_i32_0 = arith.constant 0 : i32
    %c0_i32_1 = arith.constant 0 : i32
    %c0_i32_2 = arith.constant 0 : i32
    return %c0_i32, %c0_i32_0, %c0_i32_1 : i32, i32, i32
  }
  func.func @transform_4(%arg0: i32, %arg1: i32) -> (i32, i32) {
    %c0_i32 = arith.constant 0 : i32
    %c0_i32_0 = arith.constant 0 : i32
    %c0_i32_1 = arith.constant 0 : i32
    return %c0_i32, %c0_i32_0 : i32, i32
  }
  func.func @transform_5(%arg0: i32, %arg1: i32) -> (i32, i32, i32) {
    %c0_i32 = arith.constant 0 : i32
    %c0_i32_0 = arith.constant 0 : i32
    return %arg0, %arg1, %c0_i32 : i32, i32, i32
  }
}

</mosaic_0001>

<llo_original>
// kernel: tpu_custom_call.1
$region0: #{tpu_custom_call.1}
  #allocation0 [shape = 'u32[]', space=smem, size = 0x4, offset = 0x4, fixed_abs, tag = 'smem constant byte address 0x4 - core index']
  #allocation1 [shape = 'u32[144,128]{1,0:T(1,128)}', space=vmem, size = 0x12000, scoped, tag = 'internal scratch']
  %s0 = inlined_call_operand.vmem [shape: bf16[2,1,18,128], index: 0, kind: input, shape index: {}]
  %s1 = inlined_call_operand.hbm [shape: bf16[128,128], index: 1, kind: input, shape index: {}]
  %s2 = inlined_call_operand.vmem [shape: f32[1,128], index: 2, kind: input, shape index: {}]
  %s3 = inlined_call_operand.hbm [shape: bf16[3,128,128], index: 3, kind: input, shape index: {}]
  %s4 = inlined_call_operand.vmem [shape: f32[1,128], index: 4, kind: input, shape index: {}]
  %s5 = inlined_call_operand.hbm [shape: f32[2,8,128], index: 5, kind: output, shape index: {}]
  %s6 = sld [smem:[#allocation0]]
  $region61: #{tpu_custom_call.1} parent=0
    _
  %s8 = ssub.s32 1, %s6
  %s9 = scalar_select 0, %s8, %s6
  $region1: #{tpu_custom_call.1} parent=0
    #allocation2 [shape = 'u8[32768]{0}', space=vmem, size = 0x8000, scoped, tag = 'input window, operand 1, single buffered']
    #allocation3 [shape = 's32[2]{0}', space=sflag, size = 0x8, scoped, tag = 'scoped memory for tpu_custom_call.1']
    #allocation4 [shape = 's32[2]{0}', space=sflag, size = 0x8, scoped, tag = 'scoped memory for tpu_custom_call.1']
    #allocation5 [shape = 'u8[98304]{0}', space=vmem, size = 0x18000, scoped, tag = 'input window, operand 3, single buffered']
    #allocation6 [shape = 's32[1]{0}', space=sflag, size = 0x4, scoped, tag = 'scoped memory for tpu_custom_call.1']
    #allocation7 [shape = 'u8[8192]{0}', space=vmem, size = 0x2000, scoped, tag = 'output window, operand 0']
    %10 = vsyncpa [#allocation3], 0
    %11 = vsyncpa [#allocation6], 0
    %12 = vsyncpa [#allocation4], 0
    %s13 = scalar_lea.sflag [#allocation4], 1
    %14 = vsyncpa %s13, 0
    loop: start=0, step=1, limit=4
    $region2: #{tpu_custom_call.1} parent=1 // loop_pre_header
      _
    $region3: #{tpu_custom_call.1} parent=1 // loop_header
      %s16 = sphi 0, %s20
      %p17 = scmp.ge.s32.totalorder %s16, 4
      %s23 = sphi 0, %s35
      %s24 = sphi 0, %s31
      %s25 = sphi 0, %s23
      %s26 = sphi 0, %s24
      %s27 = sphi 0, %s25
      %s28 = sphi 0, %s26
      %s40 = sphi 0, %s42
      %s43 = sphi 0, %s40
      %s44 = sphi 0, %s43
      %s60 = sphi 0, %s44
      %s64 = sphi 0, %s64
      %s66 = sphi 0, %s64
      %s67 = sphi 0, %s66
      %s81 = sphi 0, %s67
      %s85 = sphi 0, %s85
      %s87 = sphi 0, %s85
      %s88 = sphi 0, %s87
      %s102 = sphi 0, %s88
      %s106 = sphi 0, %s106
      %s108 = sphi 0, %s106
      %s109 = sphi 0, %s108
      %s123 = sphi 0, %s109
      %s127 = sphi 0, %s127
      %s129 = sphi 0, %s127
      %s130 = sphi 0, %s129
      %s144 = sphi 0, %s130
      %s152 = sphi 0, %s154
      %s155 = sphi 0, %s152
      %s156 = sphi 0, %s155
      %s172 = sphi 0, %s156
    $region4: #{tpu_custom_call.1} parent=1 // loop_header_branch
      %19 = sbr.rel (%p17) target = $region8
    $region5: #{tpu_custom_call.1} parent=1 // loop_body
      %s21 = ssub.s32 %s16, 1
      %s22 = ssub.s32 %s16, 2
      %s29 = sadd.s32 1, %s24
      %p30 = scmp.ge.s32.totalorder %s29, 1
      %s31 = scalar_select %p30, 0, %s29
      %s32 = sadd.s32 1, %s23
      %s33 = scalar_select %p30, %s32, %s23
      %p34 = scmp.ge.s32.totalorder %s33, 2
      %s35 = scalar_select %p34, 0, %s33
      %s36 = ssub.s32 %s23, %s35
      %s37 = ssub.s32 %s24, %s31
      %s38 = sor.u32 %s36, %s37
      %p39 = scmp.eq.s32.totalorder %s38, 0
      %s41 = sadd.s32 %s40, 1
      %s42 = scalar_select %p39, %s40, %s41
      %p45 = pneg %p39
      %p46 = scmp.eq.s32.totalorder %s16, 1
      %p47 = por %p45, %p46
      %p48 = scmp.ne.s32.totalorder %s40, %s43
      %p49 = scmp.eq.s32.totalorder %s16, 0
      %p50 = por %p48, %p49
      %p51 = scmp.ne.s32.totalorder %s40, %s43
      %p52 = scmp.eq.s32.totalorder %s21, 1
      %p53 = por %p51, %p52
      %p54 = scmp.ne.s32.totalorder %s43, %s44
      %p55 = scmp.eq.s32.totalorder %s21, 0
      %p56 = por %p54, %p55
      %p57 = scmp.ne.s32.totalorder %s43, %s44
      %p58 = scmp.eq.s32.totalorder %s22, 1
      %p59 = por %p57, %p58
      %p61 = scmp.ne.s32.totalorder %s44, %s60
      %p62 = scmp.eq.s32.totalorder %s22, 0
      %p63 = por %p61, %p62
      %s65 = sadd.s32 %s64, 1
      %p68 = scmp.eq.s32.totalorder %s16, 1
      %p69 = scmp.ne.s32.totalorder %s64, %s66
      %p70 = scmp.eq.s32.totalorder %s16, 0
      %p71 = por %p69, %p70
      %p72 = scmp.ne.s32.totalorder %s64, %s66
      %p73 = scmp.eq.s32.totalorder %s21, 1
      %p74 = por %p72, %p73
      %p75 = scmp.ne.s32.totalorder %s66, %s67
      %p76 = scmp.eq.s32.totalorder %s21, 0
      %p77 = por %p75, %p76
      %p78 = scmp.ne.s32.totalorder %s66, %s67
      %p79 = scmp.eq.s32.totalorder %s22, 1
      %p80 = por %p78, %p79
      %p82 = scmp.ne.s32.totalorder %s67, %s81
      %p83 = scmp.eq.s32.totalorder %s22, 0
      %p84 = por %p82, %p83
      %s86 = sadd.s32 %s85, 1
      %p89 = scmp.eq.s32.totalorder %s16, 1
      %p90 = scmp.ne.s32.totalorder %s85, %s87
      %p91 = scmp.eq.s32.totalorder %s16, 0
      %p92 = por %p90, %p91
      %p93 = scmp.ne.s32.totalorder %s85, %s87
      %p94 = scmp.eq.s32.totalorder %s21, 1
      %p95 = por %p93, %p94
      %p96 = scmp.ne.s32.totalorder %s87, %s88
      %p97 = scmp.eq.s32.totalorder %s21, 0
      %p98 = por %p96, %p97
      %p99 = scmp.ne.s32.totalorder %s87, %s88
      %p100 = scmp.eq.s32.totalorder %s22, 1
      %p101 = por %p99, %p100
      %p103 = scmp.ne.s32.totalorder %s88, %s102
      %p104 = scmp.eq.s32.totalorder %s22, 0
      %p105 = por %p103, %p104
      %s107 = sadd.s32 %s106, 1
      %p110 = scmp.eq.s32.totalorder %s16, 1
      %p111 = scmp.ne.s32.totalorder %s106, %s108
      %p112 = scmp.eq.s32.totalorder %s16, 0
      %p113 = por %p111, %p112
      %p114 = scmp.ne.s32.totalorder %s106, %s108
      %p115 = scmp.eq.s32.totalorder %s21, 1
      %p116 = por %p114, %p115
      %p117 = scmp.ne.s32.totalorder %s108, %s109
      %p118 = scmp.eq.s32.totalorder %s21, 0
      %p119 = por %p117, %p118
      %p120 = scmp.ne.s32.totalorder %s108, %s109
      %p121 = scmp.eq.s32.totalorder %s22, 1
      %p122 = por %p120, %p121
      %p124 = scmp.ne.s32.totalorder %s109, %s123
      %p125 = scmp.eq.s32.totalorder %s22, 0
      %p126 = por %p124, %p125
      %s128 = sadd.s32 %s127, 1
      %p131 = scmp.eq.s32.totalorder %s16, 1
      %p132 = scmp.ne.s32.totalorder %s127, %s129
      %p133 = scmp.eq.s32.totalorder %s16, 0
      %p134 = por %p132, %p133
      %p135 = scmp.ne.s32.totalorder %s127, %s129
      %p136 = scmp.eq.s32.totalorder %s21, 1
      %p137 = por %p135, %p136
      %p138 = scmp.ne.s32.totalorder %s129, %s130
      %p139 = scmp.eq.s32.totalorder %s21, 0
      %p140 = por %p138, %p139
      %p141 = scmp.ne.s32.totalorder %s129, %s130
      %p142 = scmp.eq.s32.totalorder %s22, 1
      %p143 = por %p141, %p142
      %p145 = scmp.ne.s32.totalorder %s130, %s144
      %p146 = scmp.eq.s32.totalorder %s22, 0
      %p147 = por %p145, %p146
      %s148 = ssub.s32 %s23, %s35
      %s149 = ssub.s32 %s24, %s31
      %s150 = sor.u32 %s148, %s149
      %p151 = scmp.eq.s32.totalorder %s150, 0
      %s153 = sadd.s32 %s152, 1
      %s154 = scalar_select %p151, %s152, %s153
      %p157 = pneg %p151
      %p158 = scmp.eq.s32.totalorder %s16, 1
      %p159 = por %p157, %p158
      %p160 = scmp.ne.s32.totalorder %s152, %s155
      %p161 = scmp.eq.s32.totalorder %s16, 0
      %p162 = por %p160, %p161
      %p163 = scmp.ne.s32.totalorder %s152, %s155
      %p164 = scmp.eq.s32.totalorder %s21, 1
      %p165 = por %p163, %p164
      %p166 = scmp.ne.s32.totalorder %s155, %s156
      %p167 = scmp.eq.s32.totalorder %s21, 0
      %p168 = por %p166, %p167
      %p169 = scmp.ne.s32.totalorder %s155, %s156
      %p170 = scmp.eq.s32.totalorder %s22, 1
      %p171 = por %p169, %p170
      %p173 = scmp.ne.s32.totalorder %s156, %s172
      %p174 = scmp.eq.s32.totalorder %s22, 0
      %p175 = por %p173, %p174
      %p176 = scmp.le.s32.totalorder 1, %s16
      %p177 = scmp.lt.s32.totalorder %s16, 3
      %p178 = pnand %p176, %p177
      %p179 = pneg %p178
      // Predicated region
      $region9: #{tpu_custom_call.1} parent=5 // pred_check
        _
      $region10: #{tpu_custom_call.1} parent=5 // pred_check_branch
        %181 = sbr.rel (%p178) target = $region12
      $region11: #{tpu_custom_call.1} parent=5 // pred_region
        %s182 = ssub.s32 %s16, 1
        // Predicated region
        $region13: #{tpu_custom_call.1} parent=11 // pred_check
          %p183 = pneg %p77
        $region14: #{tpu_custom_call.1} parent=11 // pred_check_branch
          %185 = sbr.rel (%p183) target = $region16
        $region15: #{tpu_custom_call.1} parent=11 // pred_region
          %s187 = ssub.s32 1024, 1024
          %188 = vsyncadd [#allocation3], %s187
          %s189 = sshll.u32 [#allocation2], 4
          %s190 = int_to_ptr.vmem [resolvable:$true] %s189
          %195 = dma.hbm_to_vmem [thread:$0]  %s1, 1024, %s190, [#allocation3], 64, 64, 4
        $region16: #{tpu_custom_call.1} parent=11 // pred_fallthru
          _
        // Predicated region
        $region17: #{tpu_custom_call.1} parent=11 // pred_check
          %p196 = pneg %p98
        $region18: #{tpu_custom_call.1} parent=11 // pred_check_branch
          %198 = sbr.rel (%p196) target = $region20
        $region19: #{tpu_custom_call.1} parent=11 // pred_region
          _
        $region20: #{tpu_custom_call.1} parent=11 // pred_fallthru
          _
        // Predicated region
        $region21: #{tpu_custom_call.1} parent=11 // pred_check
          %p199 = pneg %p119
        $region22: #{tpu_custom_call.1} parent=11 // pred_check_branch
          %201 = sbr.rel (%p199) target = $region24
        $region23: #{tpu_custom_call.1} parent=11 // pred_region
          %s203 = ssub.s32 3072, 3072
          %204 = vsyncadd [#allocation6], %s203
          %s205 = sshll.u32 [#allocation5], 4
          %s206 = int_to_ptr.vmem [resolvable:$true] %s205
          %211 = dma.hbm_to_vmem [thread:$0]  %s3, 3072, %s206, [#allocation6], 64, 64, 4
        $region24: #{tpu_custom_call.1} parent=11 // pred_fallthru
          _
        // Predicated region
        $region25: #{tpu_custom_call.1} parent=11 // pred_check
          %p212 = pneg %p140
        $region26: #{tpu_custom_call.1} parent=11 // pred_check_branch
          %214 = sbr.rel (%p212) target = $region28
        $region27: #{tpu_custom_call.1} parent=11 // pred_region
          _
        $region28: #{tpu_custom_call.1} parent=11 // pred_fallthru
          _
      $region12: #{tpu_custom_call.1} parent=5 // pred_fallthru
        _
      %p215 = scmp.lt.s32.totalorder %s16, 2
      // Predicated region
      $region29: #{tpu_custom_call.1} parent=5 // pred_check
        %p216 = pneg %p215
      $region30: #{tpu_custom_call.1} parent=5 // pred_check_branch
        %218 = sbr.rel (%p216) target = $region32
      $region31: #{tpu_custom_call.1} parent=5 // pred_region
        // Predicated region
        $region33: #{tpu_custom_call.1} parent=31 // pred_check
          %p219 = pneg %p50
        $region34: #{tpu_custom_call.1} parent=31 // pred_check_branch
          %221 = sbr.rel (%p219) target = $region36
        $region35: #{tpu_custom_call.1} parent=31 // pred_region
          %p222 = scmp.lt.s32.totalorder %s23, 1
          %s223 = scalar_select %p222, %s23, 1
          %p224 = scmp.lt.s32.totalorder %s24, 0
          %s225 = scalar_select %p224, %s24, 0
          %s226 = smul.addr %s225, 3
          %s227 = smul.addr %s223, 3
          %s228 = sadd.s32 %s226, %s227
          %s229 = smul.addr %s228, 4
          %s230 = scalar_lea.vmem %s0, %s229
        $region36: #{tpu_custom_call.1} parent=31 // pred_fallthru
          _
      $region32: #{tpu_custom_call.1} parent=5 // pred_fallthru
        _
      %p231 = scmp.le.s32.totalorder 1, %s16
      %p232 = scmp.lt.s32.totalorder %s16, 3
      %p233 = pnand %p231, %p232
      %p234 = pneg %p233
      // Predicated region
      $region37: #{tpu_custom_call.1} parent=5 // pred_check
        _
      $region38: #{tpu_custom_call.1} parent=5 // pred_check_branch
        %236 = sbr.rel (%p233) target = $region40
      $region39: #{tpu_custom_call.1} parent=5 // pred_region
        %s237 = ssub.s32 %s16, 1
        // Predicated region
        $region41: #{tpu_custom_call.1} parent=39 // pred_check
          %p238 = pneg %p77
        $region42: #{tpu_custom_call.1} parent=39 // pred_check_branch
          %240 = sbr.rel (%p238) target = $region44
        $region43: #{tpu_custom_call.1} parent=39 // pred_region
          %241 = dma.done [#allocation3], 1024
        $region44: #{tpu_custom_call.1} parent=39 // pred_fallthru
          _
        // Predicated region
        $region45: #{tpu_custom_call.1} parent=39 // pred_check
          %p242 = pneg %p119
        $region46: #{tpu_custom_call.1} parent=39 // pred_check_branch
          %244 = sbr.rel (%p242) target = $region48
        $region47: #{tpu_custom_call.1} parent=39 // pred_region
          %245 = dma.done [#allocation6], 3072
        $region48: #{tpu_custom_call.1} parent=39 // pred_fallthru
          _
        %p246 = scmp.lt.s32.totalorder %s25, 1
        %s247 = scalar_select %p246, %s25, 1
        %p248 = scmp.lt.s32.totalorder %s26, 0
        %s249 = scalar_select %p248, %s26, 0
        %s250 = smul.addr %s249, 3
        %s251 = smul.addr %s247, 3
        %s252 = sadd.s32 %s250, %s251
        %s253 = smul.addr %s252, 4
        %s254 = scalar_lea.vmem %s0, %s253
        %p255 = pneg %p56
        %p256 = pneg %p53
        %p257 = pneg %p77
        %p258 = pneg %p74
        %p259 = pneg %p98
        %p260 = pneg %p95
        %p261 = pneg %p119
        %p262 = pneg %p116
        %p263 = pneg %p140
        %p264 = pneg %p137
        %p265 = pneg %p168
        %p266 = pneg %p165
        %s267 = sand.u32 %s155, 1
        %s268 = scalar_lea.sflag [#allocation4], %s267
        %s269 = sand.u32 %s155, 1
        %s270 = smul.addr %s269, 8
        %s271 = scalar_lea.vmem [#allocation7], %s270
        %p272 = scmp.lt.s32.totalorder %s25, 1
        %s273 = scalar_select %p272, %s25, 1
        %p274 = scmp.lt.s32.totalorder %s26, 0
        %s275 = scalar_select %p274, %s26, 0
        %s276 = smul.addr %s275, 3
        %s277 = smul.addr %s273, 3
        %s278 = sadd.s32 %s276, %s277
        %s279 = smul.addr %s278, 4
        %s280 = scalar_lea.vmem %s0, %s279
        %v282 = vld [vmem:[%s280] sm:$0xf]
        %v283 = vld [vmem:[%s280 + $0x4] sm:$0xf]
        %v284 = vld [vmem:[%s280 + $0x8] sm:$0x1]
        %v285 = vld [vmem:[#allocation2] sm:$0xf]
        %v286 = vld [vmem:[#allocation2 + $0x4] sm:$0xf]
        %v287 = vld [vmem:[#allocation2 + $0x8] sm:$0xf]
        %v288 = vld [vmem:[#allocation2 + $0xc] sm:$0xf]
        %v289 = vld [vmem:[#allocation2 + $0x10] sm:$0xf]
        %v290 = vld [vmem:[#allocation2 + $0x14] sm:$0xf]
        %v291 = vld [vmem:[#allocation2 + $0x18] sm:$0xf]
        %v292 = vld [vmem:[#allocation2 + $0x1c] sm:$0xf]
        %v293 = vld [vmem:[#allocation2 + $0x20] sm:$0xf]
        %v294 = vld [vmem:[#allocation2 + $0x24] sm:$0xf]
        %v295 = vld [vmem:[#allocation2 + $0x28] sm:$0xf]
        %v296 = vld [vmem:[#allocation2 + $0x2c] sm:$0xf]
        %v297 = vld [vmem:[#allocation2 + $0x30] sm:$0xf]
        %v298 = vld [vmem:[#allocation2 + $0x34] sm:$0xf]
        %v299 = vld [vmem:[#allocation2 + $0x38] sm:$0xf]
        %v300 = vld [vmem:[#allocation2 + $0x3c] sm:$0xf]
        %v301 = vld [vmem:[%s2] sm:$0x1]
        %v303 = vlaneseq
        %v304 = vshrl.u32 %v303, 7
        %v305 = vsub.s32 0, %v304
        %v306 = vrot.slane %v301, %v305
        %v311 = vunpack.c.l.b16 %v282
        %v312 = vunpack.c.l.b16 %v283
        %v313 = vunpack.c.l.b16 %v284
        %v314 = vpack.c.b16 %v312, %v311
        %v315 = vpack.c.b16 %v313, %v313
        %v334 = vunpack.c.l.b16 %v285
        %v335 = vunpack.c.l.b16 %v286
        %v336 = vunpack.c.l.b16 %v287
        %v337 = vunpack.c.l.b16 %v288
        %v338 = vunpack.c.l.b16 %v289
        %v339 = vunpack.c.l.b16 %v290
        %v340 = vunpack.c.l.b16 %v291
        %v341 = vunpack.c.l.b16 %v292
        %v342 = vunpack.c.l.b16 %v293
        %v343 = vunpack.c.l.b16 %v294
        %v344 = vunpack.c.l.b16 %v295
        %v345 = vunpack.c.l.b16 %v296
        %v346 = vunpack.c.l.b16 %v297
        %v347 = vunpack.c.l.b16 %v298
        %v348 = vunpack.c.l.b16 %v299
        %v349 = vunpack.c.l.b16 %v300
        %v350 = vpack.c.b16 %v335, %v334
        %v351 = vpack.c.b16 %v337, %v336
        %v352 = vpack.c.b16 %v339, %v338
        %v353 = vpack.c.b16 %v341, %v340
        %v354 = vpack.c.b16 %v343, %v342
        %v355 = vpack.c.b16 %v345, %v344
        %v356 = vpack.c.b16 %v347, %v346
        %v357 = vpack.c.b16 %v349, %v348
        %366 = vmatprep.subr.bf16.mxu0 0
        %367 = vmatpush1.bf16.msra.mxu0 %v357
        %368 = vmatprep.subr.bf16.mxu0 0
        %369 = vmatpush1.bf16.msra.mxu0 %v356
        %370 = vmatprep.subr.bf16.mxu0 0
        %371 = vmatpush1.bf16.msra.mxu0 %v355
        %372 = vmatprep.subr.bf16.mxu0 0
        %373 = vmatpush1.bf16.msra.mxu0 %v354
        %374 = vmatprep.subr.bf16.mxu0 0
        %375 = vmatpush1.bf16.msra.mxu0 %v353
        %376 = vmatprep.subr.bf16.mxu0 0
        %377 = vmatpush1.bf16.msra.mxu0 %v352
        %378 = vmatprep.subr.bf16.mxu0 0
        %379 = vmatpush1.bf16.msra.mxu0 %v351
        %380 = vmatprep.subr.bf16.mxu0 0
        %381 = vmatpush1.bf16.msra.mxu0 %v350
        %382 = vmatprep.subr.bf16.mxu0 0
        %383 = vmatpush2.bf16.msra.mxu0 0
        %384 = vmatprep.subr.bf16.mxu0 0
        %385 = vmatpush2.bf16.msra.mxu0 0
        %386 = vmatprep.subr.bf16.mxu0 0
        %387 = vmatpush2.bf16.msra.mxu0 0
        %388 = vmatprep.subr.bf16.mxu0 0
        %389 = vmatpush2.bf16.msra.mxu0 0
        %390 = vmatprep.subr.bf16.mxu0 0
        %391 = vmatpush2.bf16.msra.mxu0 0
        %392 = vmatprep.subr.bf16.mxu0 0
        %393 = vmatpush2.bf16.msra.mxu0 0
        %394 = vmatprep.subr.bf16.mxu0 0
        %395 = vmatpush2.bf16.msra.mxu0 0
        %396 = vmatprep.subr.bf16.mxu0 0
        %397 = vmatpush2.bf16.msra.mxu0 0
        %398 = vmatprep.mubr.bf16.mxu0 0
        %399 = vmatmul.mubr.bf16.gmra.mxu0 %v314
        %v400 = vpop.f32.mrf.mxu0
        %v401 = vadd.f32 %v306, %v400
        %v402 = vpop.f32.mrf.mxu0
        %v403 = vpop.f32.mrf.mxu0
        %v404 = vadd.f32 %v306, %v403
        %v405 = vpop.f32.mrf.mxu0
        %406 = vmatprep.mubr.bf16.mxu0 0
        %407 = vmatmul.mubr.bf16.gmra.mxu0 %v315
        %v408 = vpop.f32.mrf.mxu0
        %v409 = vadd.f32 %v306, %v408
        %v410 = vpop.f32.mrf.mxu0
        %v411 = vpop.f32.mrf.mxu0
        %v412 = vpop.f32.mrf.mxu0
        %413 = vdwg.mxu0
        %v414 = vmax.f32 %v401, 0.0
        %v415 = vmax.f32 %v404, 0.0
        %v416 = vmax.f32 %v409, 0.0
        %v417 = vlaneseq
        %v418 = vshrl.u32 %v417, 7
        %v419 = vadd.s32 %v418, 8
        %v420 = vadd.s32 %v418, 16
        %p421 = scmp.gt.s32.totalorder %s26, 0
        %vm422 = vcmp.gt.s32.totalorder %v418, 0
        %vm423 = vcmp.gt.s32.totalorder %v419, 0
        %vm424 = vcmp.gt.s32.totalorder %v420, 0
        %s425 = scalar_select %p421, 1, 0
        %v426 = vstv %s425
        %vm427 = vcmp.eq.s32.totalorder %v426, 1
        %vm428 = vmor %vm427, %vm422
        %vm429 = vmor %vm427, %vm423
        %vm430 = vmor %vm427, %vm424
        %p431 = scmp.lt.s32.totalorder %s26, 0
        %vm432 = vcmp.lt.s32.totalorder %v418, 17
        %vm433 = vcmp.lt.s32.totalorder %v419, 17
        %vm434 = vcmp.lt.s32.totalorder %v420, 17
        %s435 = scalar_select %p431, 1, 0
        %v436 = vstv %s435
        %vm437 = vcmp.eq.s32.totalorder %v436, 1
        %vm438 = vmor %vm437, %vm432
        %vm439 = vmor %vm437, %vm433
        %vm440 = vmor %vm437, %vm434
        %vm441 = vmand %vm428, %vm438
        %vm442 = vmand %vm429, %vm439
        %vm443 = vmand %vm430, %vm440
        %v444 = vsel %vm441, 1, 0
        %v445 = vsel %vm442, 1, 0
        %v446 = vsel %vm443, 1, 0
        %vm447 = vcmp.eq.s32.totalorder %v444, 1
        %vm448 = vcmp.eq.s32.totalorder %v445, 1
        %vm449 = vcmp.eq.s32.totalorder %v446, 1
        %v450 = vsel %vm447, %v414, 0.0
        %v451 = vsel %vm448, %v415, 0.0
        %v452 = vsel %vm449, %v416, 0.0
        %v453 = vpack.c.bf16 %v451, %v450
        %v454 = vpack.c.bf16 %v452, %v452
        %v455 = vld [vmem:[#allocation5] sm:$0xf]
        %v456 = vld [vmem:[#allocation5 + $0x4] sm:$0xf]
        %v457 = vld [vmem:[#allocation5 + $0x8] sm:$0xf]
        %v458 = vld [vmem:[#allocation5 + $0xc] sm:$0xf]
        %v459 = vld [vmem:[#allocation5 + $0x10] sm:$0xf]
        %v460 = vld [vmem:[#allocation5 + $0x14] sm:$0xf]
        %v461 = vld [vmem:[#allocation5 + $0x18] sm:$0xf]
        %v462 = vld [vmem:[#allocation5 + $0x1c] sm:$0xf]
        %v463 = vld [vmem:[#allocation5 + $0x20] sm:$0xf]
        %v464 = vld [vmem:[#allocation5 + $0x24] sm:$0xf]
        %v465 = vld [vmem:[#allocation5 + $0x28] sm:$0xf]
        %v466 = vld [vmem:[#allocation5 + $0x2c] sm:$0xf]
        %v467 = vld [vmem:[#allocation5 + $0x30] sm:$0xf]
        %v468 = vld [vmem:[#allocation5 + $0x34] sm:$0xf]
        %v469 = vld [vmem:[#allocation5 + $0x38] sm:$0xf]
        %v470 = vld [vmem:[#allocation5 + $0x3c] sm:$0xf]
        %s471 = scalar_lea.vmem [#allocation5], 64
        %v472 = vld [vmem:[%s471] sm:$0xf]
        %v473 = vld [vmem:[%s471 + $0x4] sm:$0xf]
        %v474 = vld [vmem:[%s471 + $0x8] sm:$0xf]
        %v475 = vld [vmem:[%s471 + $0xc] sm:$0xf]
        %v476 = vld [vmem:[%s471 + $0x10] sm:$0xf]
        %v477 = vld [vmem:[%s471 + $0x14] sm:$0xf]
        %v478 = vld [vmem:[%s471 + $0x18] sm:$0xf]
        %v479 = vld [vmem:[%s471 + $0x1c] sm:$0xf]
        %v480 = vld [vmem:[%s471 + $0x20] sm:$0xf]
        %v481 = vld [vmem:[%s471 + $0x24] sm:$0xf]
        %v482 = vld [vmem:[%s471 + $0x28] sm:$0xf]
        %v483 = vld [vmem:[%s471 + $0x2c] sm:$0xf]
        %v484 = vld [vmem:[%s471 + $0x30] sm:$0xf]
        %v485 = vld [vmem:[%s471 + $0x34] sm:$0xf]
        %v486 = vld [vmem:[%s471 + $0x38] sm:$0xf]
        %v487 = vld [vmem:[%s471 + $0x3c] sm:$0xf]
        %vm488 = vsmask.f32 7424
        %v490 = vshrl.u32 %v453, 16
        %v492 = vshll.u32 %v453, 16
        %v494 = vrot.slane %v492, 1
        %v495 = vor.u32 %v490, %v494
        %v497 = vshll.u32 %v454, 16
        %v499 = vrot.slane %v497, 1
        %v500 = vsel %vm488, %v495, %v499
        %v518 = vunpack.c.l.b16 %v472
        %v519 = vunpack.c.l.b16 %v473
        %v520 = vunpack.c.l.b16 %v474
        %v521 = vunpack.c.l.b16 %v475
        %v522 = vunpack.c.l.b16 %v476
        %v523 = vunpack.c.l.b16 %v477
        %v524 = vunpack.c.l.b16 %v478
        %v525 = vunpack.c.l.b16 %v479
        %v526 = vunpack.c.l.b16 %v480
        %v527 = vunpack.c.l.b16 %v481
        %v528 = vunpack.c.l.b16 %v482
        %v529 = vunpack.c.l.b16 %v483
        %v530 = vunpack.c.l.b16 %v484
        %v531 = vunpack.c.l.b16 %v485
        %v532 = vunpack.c.l.b16 %v486
        %v533 = vunpack.c.l.b16 %v487
        %v534 = vpack.c.b16 %v519, %v518
        %v535 = vpack.c.b16 %v521, %v520
        %v536 = vpack.c.b16 %v523, %v522
        %v537 = vpack.c.b16 %v525, %v524
        %v538 = vpack.c.b16 %v527, %v526
        %v539 = vpack.c.b16 %v529, %v528
        %v540 = vpack.c.b16 %v531, %v530
        %v541 = vpack.c.b16 %v533, %v532
        %550 = vmatprep.subr.bf16.mxu0 0
        %551 = vmatpush1.bf16.msra.mxu0 %v541
        %552 = vmatprep.subr.bf16.mxu0 0
        %553 = vmatpush1.bf16.msra.mxu0 %v540
        %554 = vmatprep.subr.bf16.mxu0 0
        %555 = vmatpush1.bf16.msra.mxu0 %v539
        %556 = vmatprep.subr.bf16.mxu0 0
        %557 = vmatpush1.bf16.msra.mxu0 %v538
        %558 = vmatprep.subr.bf16.mxu0 0
        %559 = vmatpush1.bf16.msra.mxu0 %v537
        %560 = vmatprep.subr.bf16.mxu0 0
        %561 = vmatpush1.bf16.msra.mxu0 %v536
        %562 = vmatprep.subr.bf16.mxu0 0
        %563 = vmatpush1.bf16.msra.mxu0 %v535
        %564 = vmatprep.subr.bf16.mxu0 0
        %565 = vmatpush1.bf16.msra.mxu0 %v534
        %566 = vmatprep.subr.bf16.mxu0 0
        %567 = vmatpush2.bf16.msra.mxu0 0
        %568 = vmatprep.subr.bf16.mxu0 0
        %569 = vmatpush2.bf16.msra.mxu0 0
        %570 = vmatprep.subr.bf16.mxu0 0
        %571 = vmatpush2.bf16.msra.mxu0 0
        %572 = vmatprep.subr.bf16.mxu0 0
        %573 = vmatpush2.bf16.msra.mxu0 0
        %574 = vmatprep.subr.bf16.mxu0 0
        %575 = vmatpush2.bf16.msra.mxu0 0
        %576 = vmatprep.subr.bf16.mxu0 0
        %577 = vmatpush2.bf16.msra.mxu0 0
        %578 = vmatprep.subr.bf16.mxu0 0
        %579 = vmatpush2.bf16.msra.mxu0 0
        %580 = vmatprep.subr.bf16.mxu0 0
        %581 = vmatpush2.bf16.msra.mxu0 0
        %582 = vmatprep.mubr.bf16.mxu0 0
        %583 = vmatmul.mubr.bf16.gmra.mxu0 %v500
        %v584 = vpop.f32.mrf.mxu0
        %v585 = vadd.f32 0.0, %v584
        %v586 = vpop.f32.mrf.mxu0
        %v587 = vpop.f32.mrf.mxu0
        %v588 = vadd.f32 0.0, %v587
        %v589 = vpop.f32.mrf.mxu0
        %590 = vdwg.mxu0
        %v607 = vunpack.c.l.b16 %v455
        %v608 = vunpack.c.l.b16 %v456
        %v609 = vunpack.c.l.b16 %v457
        %v610 = vunpack.c.l.b16 %v458
        %v611 = vunpack.c.l.b16 %v459
        %v612 = vunpack.c.l.b16 %v460
        %v613 = vunpack.c.l.b16 %v461
        %v614 = vunpack.c.l.b16 %v462
        %v615 = vunpack.c.l.b16 %v463
        %v616 = vunpack.c.l.b16 %v464
        %v617 = vunpack.c.l.b16 %v465
        %v618 = vunpack.c.l.b16 %v466
        %v619 = vunpack.c.l.b16 %v467
        %v620 = vunpack.c.l.b16 %v468
        %v621 = vunpack.c.l.b16 %v469
        %v622 = vunpack.c.l.b16 %v470
        %v623 = vpack.c.b16 %v608, %v607
        %v624 = vpack.c.b16 %v610, %v609
        %v625 = vpack.c.b16 %v612, %v611
        %v626 = vpack.c.b16 %v614, %v613
        %v627 = vpack.c.b16 %v616, %v615
        %v628 = vpack.c.b16 %v618, %v617
        %v629 = vpack.c.b16 %v620, %v619
        %v630 = vpack.c.b16 %v622, %v621
        %639 = vmatprep.subr.bf16.mxu0 0
        %640 = vmatpush1.bf16.msra.mxu0 %v630
        %641 = vmatprep.subr.bf16.mxu0 0
        %642 = vmatpush1.bf16.msra.mxu0 %v629
        %643 = vmatprep.subr.bf16.mxu0 0
        %644 = vmatpush1.bf16.msra.mxu0 %v628
        %645 = vmatprep.subr.bf16.mxu0 0
        %646 = vmatpush1.bf16.msra.mxu0 %v627
        %647 = vmatprep.subr.bf16.mxu0 0
        %648 = vmatpush1.bf16.msra.mxu0 %v626
        %649 = vmatprep.subr.bf16.mxu0 0
        %650 = vmatpush1.bf16.msra.mxu0 %v625
        %651 = vmatprep.subr.bf16.mxu0 0
        %652 = vmatpush1.bf16.msra.mxu0 %v624
        %653 = vmatprep.subr.bf16.mxu0 0
        %654 = vmatpush1.bf16.msra.mxu0 %v623
        %655 = vmatprep.subr.bf16.mxu0 0
        %656 = vmatpush2.bf16.msra.mxu0 0
        %657 = vmatprep.subr.bf16.mxu0 0
        %658 = vmatpush2.bf16.msra.mxu0 0
        %659 = vmatprep.subr.bf16.mxu0 0
        %660 = vmatpush2.bf16.msra.mxu0 0
        %661 = vmatprep.subr.bf16.mxu0 0
        %662 = vmatpush2.bf16.msra.mxu0 0
        %663 = vmatprep.subr.bf16.mxu0 0
        %664 = vmatpush2.bf16.msra.mxu0 0
        %665 = vmatprep.subr.bf16.mxu0 0
        %666 = vmatpush2.bf16.msra.mxu0 0
        %667 = vmatprep.subr.bf16.mxu0 0
        %668 = vmatpush2.bf16.msra.mxu0 0
        %669 = vmatprep.subr.bf16.mxu0 0
        %670 = vmatpush2.bf16.msra.mxu0 0
        %671 = vmatprep.mubr.bf16.mxu0 0
        %672 = vmatmul.mubr.bf16.gmra.mxu0 %v453
        %v673 = vpop.f32.mrf.mxu0
        %v674 = vadd.f32 %v585, %v673
        %v675 = vpop.f32.mrf.mxu0
        %v676 = vpop.f32.mrf.mxu0
        %v677 = vadd.f32 %v588, %v676
        %v678 = vpop.f32.mrf.mxu0
        %679 = vdwg.mxu0
        %s680 = scalar_lea.vmem [#allocation5], 128
        %v681 = vld [vmem:[%s680] sm:$0xf]
        %v682 = vld [vmem:[%s680 + $0x4] sm:$0xf]
        %v683 = vld [vmem:[%s680 + $0x8] sm:$0xf]
        %v684 = vld [vmem:[%s680 + $0xc] sm:$0xf]
        %v685 = vld [vmem:[%s680 + $0x10] sm:$0xf]
        %v686 = vld [vmem:[%s680 + $0x14] sm:$0xf]
        %v687 = vld [vmem:[%s680 + $0x18] sm:$0xf]
        %v688 = vld [vmem:[%s680 + $0x1c] sm:$0xf]
        %v689 = vld [vmem:[%s680 + $0x20] sm:$0xf]
        %v690 = vld [vmem:[%s680 + $0x24] sm:$0xf]
        %v691 = vld [vmem:[%s680 + $0x28] sm:$0xf]
        %v692 = vld [vmem:[%s680 + $0x2c] sm:$0xf]
        %v693 = vld [vmem:[%s680 + $0x30] sm:$0xf]
        %v694 = vld [vmem:[%s680 + $0x34] sm:$0xf]
        %v695 = vld [vmem:[%s680 + $0x38] sm:$0xf]
        %v696 = vld [vmem:[%s680 + $0x3c] sm:$0xf]
        %vm699 = vcmask 1046528
        %v700 = vrot.slane %v453, 1
        %v701 = vrot.slane %v454, 1
        %v702 = vsel %vm699, %v700, %v701
        %v720 = vunpack.c.l.b16 %v681
        %v721 = vunpack.c.l.b16 %v682
        %v722 = vunpack.c.l.b16 %v683
        %v723 = vunpack.c.l.b16 %v684
        %v724 = vunpack.c.l.b16 %v685
        %v725 = vunpack.c.l.b16 %v686
        %v726 = vunpack.c.l.b16 %v687
        %v727 = vunpack.c.l.b16 %v688
        %v728 = vunpack.c.l.b16 %v689
        %v729 = vunpack.c.l.b16 %v690
        %v730 = vunpack.c.l.b16 %v691
        %v731 = vunpack.c.l.b16 %v692
        %v732 = vunpack.c.l.b16 %v693
        %v733 = vunpack.c.l.b16 %v694
        %v734 = vunpack.c.l.b16 %v695
        %v735 = vunpack.c.l.b16 %v696
        %v736 = vpack.c.b16 %v721, %v720
        %v737 = vpack.c.b16 %v723, %v722
        %v738 = vpack.c.b16 %v725, %v724
        %v739 = vpack.c.b16 %v727, %v726
        %v740 = vpack.c.b16 %v729, %v728
        %v741 = vpack.c.b16 %v731, %v730
        %v742 = vpack.c.b16 %v733, %v732
        %v743 = vpack.c.b16 %v735, %v734
        %752 = vmatprep.subr.bf16.mxu0 0
        %753 = vmatpush1.bf16.msra.mxu0 %v743
        %754 = vmatprep.subr.bf16.mxu0 0
        %755 = vmatpush1.bf16.msra.mxu0 %v742
        %756 = vmatprep.subr.bf16.mxu0 0
        %757 = vmatpush1.bf16.msra.mxu0 %v741
        %758 = vmatprep.subr.bf16.mxu0 0
        %759 = vmatpush1.bf16.msra.mxu0 %v740
        %760 = vmatprep.subr.bf16.mxu0 0
        %761 = vmatpush1.bf16.msra.mxu0 %v739
        %762 = vmatprep.subr.bf16.mxu0 0
        %763 = vmatpush1.bf16.msra.mxu0 %v738
        %764 = vmatprep.subr.bf16.mxu0 0
        %765 = vmatpush1.bf16.msra.mxu0 %v737
        %766 = vmatprep.subr.bf16.mxu0 0
        %767 = vmatpush1.bf16.msra.mxu0 %v736
        %768 = vmatprep.subr.bf16.mxu0 0
        %769 = vmatpush2.bf16.msra.mxu0 0
        %770 = vmatprep.subr.bf16.mxu0 0
        %771 = vmatpush2.bf16.msra.mxu0 0
        %772 = vmatprep.subr.bf16.mxu0 0
        %773 = vmatpush2.bf16.msra.mxu0 0
        %774 = vmatprep.subr.bf16.mxu0 0
        %775 = vmatpush2.bf16.msra.mxu0 0
        %776 = vmatprep.subr.bf16.mxu0 0
        %777 = vmatpush2.bf16.msra.mxu0 0
        %778 = vmatprep.subr.bf16.mxu0 0
        %779 = vmatpush2.bf16.msra.mxu0 0
        %780 = vmatprep.subr.bf16.mxu0 0
        %781 = vmatpush2.bf16.msra.mxu0 0
        %782 = vmatprep.subr.bf16.mxu0 0
        %783 = vmatpush2.bf16.msra.mxu0 0
        %784 = vmatprep.mubr.bf16.mxu0 0
        %785 = vmatmul.mubr.bf16.gmra.mxu0 %v702
        %v786 = vpop.f32.mrf.mxu0
        %v787 = vadd.f32 0.0, %v786
        %v788 = vpop.f32.mrf.mxu0
        %v789 = vpop.f32.mrf.mxu0
        %v790 = vadd.f32 0.0, %v789
        %v791 = vpop.f32.mrf.mxu0
        %792 = vdwg.mxu0
        %v793 = vadd.f32 %v674, %v787
        %v794 = vadd.f32 %v677, %v790
        %v795 = vld [vmem:[%s4] sm:$0x1]
        %v797 = vlaneseq
        %v798 = vshrl.u32 %v797, 7
        %v799 = vsub.s32 0, %v798
        %v800 = vrot.slane %v795, %v799
        %v802 = vadd.f32 %v793, %v800
        %v803 = vadd.f32 %v794, %v800
        %v804 = vmax.f32 %v802, 0.0
        %v805 = vmax.f32 %v803, 0.0
        %v808 = vcombine.high %v804, %v804
        %v810 = vunpack.c.l.s4 1983009808
        %v811 = vunpack.c.0.s8 %v810
        %v812 = vlaneseq
        %v813 = vshrl.u32 %v812, 7
        %v814 = vsub.s32 %v811, %v813
        %v815 = vrot.slane %v804, %v814
        %v817 = vunpack.c.l.s4 1983009808
        %v818 = vunpack.c.0.s8 %v817
        %v819 = vlaneseq
        %v820 = vshrl.u32 %v819, 7
        %v821 = vsub.s32 %v818, %v820
        %v822 = vrot.slane %v808, %v821
        %v823 = vcombine.high %v815, %v815
        %v824 = vcombine.high %v822, %v822
        %v825 = vcombine.high %v805, %v805
        %v827 = vunpack.c.l.s4 1983009808
        %v828 = vunpack.c.0.s8 %v827
        %v829 = vlaneseq
        %v830 = vshrl.u32 %v829, 7
        %v831 = vsub.s32 %v828, %v830
        %v832 = vrot.slane %v805, %v831
        %v834 = vunpack.c.l.s4 1983009808
        %v835 = vunpack.c.0.s8 %v834
        %v836 = vlaneseq
        %v837 = vshrl.u32 %v836, 7
        %v838 = vsub.s32 %v835, %v837
        %v839 = vrot.slane %v825, %v838
        %v840 = vcombine.high %v832, %v832
        %v841 = vcombine.high %v839, %v839
        %vm850 = vcmask 1041408
        %v851 = vsel %vm850, %v815, -inf
        %v852 = vrot.slane %v851, 4
        %v853 = vmax.f32 %v851, %v852
        %v854 = vrot.slane %v853, 2
        %v855 = vmax.f32 %v853, %v854
        %v856 = vrot.slane %v855, 1
        %v857 = vmax.f32 %v855, %v856
        %v858 = vsel %vm850, %v823, -inf
        %v859 = vrot.slane %v858, 4
        %v860 = vmax.f32 %v858, %v859
        %v861 = vrot.slane %v860, 2
        %v862 = vmax.f32 %v860, %v861
        %v863 = vrot.slane %v862, 1
        %v864 = vmax.f32 %v862, %v863
        %v865 = vsel %vm850, %v822, -inf
        %v866 = vrot.slane %v865, 4
        %v867 = vmax.f32 %v865, %v866
        %v868 = vrot.slane %v867, 2
        %v869 = vmax.f32 %v867, %v868
        %v870 = vrot.slane %v869, 1
        %v871 = vmax.f32 %v869, %v870
        %v872 = vsel %vm850, %v824, -inf
        %v873 = vrot.slane %v872, 4
        %v874 = vmax.f32 %v872, %v873
        %v875 = vrot.slane %v874, 2
        %v876 = vmax.f32 %v874, %v875
        %v877 = vrot.slane %v876, 1
        %v878 = vmax.f32 %v876, %v877
        %v879 = vsel %vm850, %v832, -inf
        %v880 = vrot.slane %v879, 4
        %v881 = vmax.f32 %v879, %v880
        %v882 = vrot.slane %v881, 2
        %v883 = vmax.f32 %v881, %v882
        %v884 = vrot.slane %v883, 1
        %v885 = vmax.f32 %v883, %v884
        %v886 = vsel %vm850, %v840, -inf
        %v887 = vrot.slane %v886, 4
        %v888 = vmax.f32 %v886, %v887
        %v889 = vrot.slane %v888, 2
        %v890 = vmax.f32 %v888, %v889
        %v891 = vrot.slane %v890, 1
        %v892 = vmax.f32 %v890, %v891
        %v893 = vsel %vm850, %v839, -inf
        %v894 = vrot.slane %v893, 4
        %v895 = vmax.f32 %v893, %v894
        %v896 = vrot.slane %v895, 2
        %v897 = vmax.f32 %v895, %v896
        %v898 = vrot.slane %v897, 1
        %v899 = vmax.f32 %v897, %v898
        %v900 = vsel %vm850, %v841, -inf
        %v901 = vrot.slane %v900, 4
        %v902 = vmax.f32 %v900, %v901
        %v903 = vrot.slane %v902, 2
        %v904 = vmax.f32 %v902, %v903
        %v905 = vrot.slane %v904, 1
        %v906 = vmax.f32 %v904, %v905
        %vm915 = vcmask 1041409
        %v916 = vsel %vm915, %v864, %v857
        %vm917 = vcmask 1042434
        %v918 = vsel %vm917, %v871, %v916
        %vm919 = vcmask 1043459
        %v920 = vsel %vm919, %v878, %v918
        %vm921 = vcmask 1044484
        %v922 = vsel %vm921, %v885, %v920
        %vm923 = vcmask 1045509
        %v924 = vsel %vm923, %v892, %v922
        %vm925 = vcmask 1046534
        %v926 = vsel %vm925, %v899, %v924
        %vm927 = vcmask 1047559
        %v928 = vsel %vm927, %v906, %v926
        %930 = vst [vmem:[%s271] sm:$0xff] %v928
        %s931 = sand.u32 %s155, 1
        %s932 = scalar_lea.sflag [#allocation4], %s931
        %s933 = sand.u32 %s155, 1
        %s934 = smul.addr %s933, 8
        %s935 = scalar_lea.vmem [#allocation7], %s934
        // Predicated region
        $region49: #{tpu_custom_call.1} parent=39 // pred_check
          %p936 = pneg %p165
        $region50: #{tpu_custom_call.1} parent=39 // pred_check_branch
          %938 = sbr.rel (%p936) target = $region52
        $region51: #{tpu_custom_call.1} parent=39 // pred_region
          %s940 = ssub.s32 128, 128
          %941 = vsyncadd %s932, %s940
          %s942 = sadd.s32 %s26, %s25
          %s943 = smul.addr %s942, 128
          %s944 = scalar_lea.hbm %s5, %s943
          %s946 = sshll.u32 %s935, 4
          %s947 = int_to_ptr.vmem [resolvable:$true] %s946
          %949 = dma.vmem_to_hbm [thread:$0]  %s947, 128, %s944, %s932
        $region52: #{tpu_custom_call.1} parent=39 // pred_fallthru
          _
      $region40: #{tpu_custom_call.1} parent=5 // pred_fallthru
        _
      %p950 = scmp.le.s32.totalorder 2, %s16
      // Predicated region
      $region53: #{tpu_custom_call.1} parent=5 // pred_check
        %p951 = pneg %p950
      $region54: #{tpu_custom_call.1} parent=5 // pred_check_branch
        %953 = sbr.rel (%p951) target = $region56
      $region55: #{tpu_custom_call.1} parent=5 // pred_region
        %s954 = ssub.s32 %s16, 2
        // Predicated region
        $region57: #{tpu_custom_call.1} parent=55 // pred_check
          %p955 = pneg %p171
        $region58: #{tpu_custom_call.1} parent=55 // pred_check_branch
          %957 = sbr.rel (%p955) target = $region60
        $region59: #{tpu_custom_call.1} parent=55 // pred_region
          %s958 = sand.u32 %s156, 1
          %s959 = scalar_lea.sflag [#allocation4], %s958
          %s960 = sand.u32 %s156, 1
          %s961 = smul.addr %s960, 8
          %s962 = scalar_lea.vmem [#allocation7], %s961
          %963 = dma.done %s959, 128
        $region60: #{tpu_custom_call.1} parent=55 // pred_fallthru
          _
      $region56: #{tpu_custom_call.1} parent=5 // pred_fallthru
        _
    $region6: #{tpu_custom_call.1} parent=1 // loop_footer
      %s20 = sadd.s32 1, %s16
    $region7: #{tpu_custom_call.1} parent=1 // loop_footer_branch
      %15 = sbr.rel target = $region3
    $region8: #{tpu_custom_call.1} parent=1 // loop_exit
      _
    %964 = vsyncpa [#allocation3], 1
    %s965 = scalar_lea.sflag [#allocation3], 1
    %966 = vsyncpa %s965, 1
    %967 = vsyncpa [#allocation6], 1
    %968 = vsyncpa [#allocation4], 1
    %s969 = scalar_lea.sflag [#allocation4], 1
    %970 = vsyncpa %s969, 1

</llo_original>
